<compile_context>
chip_gen: v6e
topology: v6e:2x2x1
jax: 0.10.0
libtpu: 0.0.40
codegen_flags: <defaults>
</compile_context>

<pallas_src>
import functools

import jax
import jax.numpy as jnp
from jax.experimental import pallas as pl
from jax.experimental.pallas import tpu as pltpu

LANE = 128  # lane width of a vreg; pad num_labels up to this for dense stores


def make_classifier_params(weight, bias, lane=LANE):
    """One-time (init / parameter-load) fusion of classifier weight + bias.

    weight: (H, L) (= W^T of nn.Linear), bias: (L,)
    Returns wb_pad: (H+1, l_pad) f32 — rows 0..H-1 are the zero-padded weight,
    row H is the zero-padded bias.
    """
    H, L = weight.shape
    l_pad = max(lane, pl.cdiv(L, lane) * lane)
    wb = jnp.zeros((H + 1, l_pad), dtype=weight.dtype)
    wb = wb.at[:H, :L].set(weight)
    wb = wb.at[H, :L].set(bias)
    return wb


@functools.partial(jax.jit, static_argnames=("num_labels",))
def bert_classifier_forward(x, wb_pad, num_labels):
    """x: (B, H) f32 pooled vector, wb_pad: (H+1, l_pad) cached padded params.

    Dropout at inference time is an identity (PyTorch eval semantics).
    TODO(synk): training-mode dropout (pltpu.prng_seed + prng_random_bits mask)
    not emitted; this head is inference-only.
    """
    B, H = x.shape
    l_pad = wb_pad.shape[1]

    def classifier_kernel(x_ref, wb_ref, o_ref):
        x_v = x_ref[...]                      # (B, H)
        w = wb_ref[0:H, :]                    # (H, l_pad)  static ref slice
        b = wb_ref[H:H + 1, :]                # (1, l_pad)  static ref slice
        logits = jnp.dot(x_v, w, preferred_element_type=jnp.float32) + b
        o_ref[...] = logits.astype(o_ref.dtype)   # single unmasked lane-dense store

    vmem = pl.BlockSpec(memory_space=pltpu.MemorySpace.VMEM)

    cost = pl.CostEstimate(
        flops=2 * B * H * l_pad,
        transcendentals=0,
        bytes_accessed=(B * H + (H + 1) * l_pad + B * l_pad) * 4,
    )

    # Grid-free call: no pipeline prologue, no double-buffering — the whole
    # problem (a few KB) lives in VMEM and the kernel body runs exactly once.
    logits_pad = pl.pallas_call(
        classifier_kernel,
        out_shape=jax.ShapeDtypeStruct((B, l_pad), jnp.float32),
        in_specs=[vmem, vmem],
        out_specs=vmem,
        cost_estimate=cost,
    )(x, wb_pad)

    # Inside jit: this slice fuses with the consumer (here, the returned
    # value) rather than being a standalone masked-store XLA op.
    return logits_pad[:, :num_labels]


if __name__ == "__main__":
    # Small shapes consistent with the module: hidden_size=32, num_labels=2.
    batch = 8
    hidden_size = 32
    num_labels = 2

    key = jax.random.PRNGKey(0)
    kx, kw, kb = jax.random.split(key, 3)

    # "pooled_output" surrogate — the module as written feeds input_ids
    # straight into dropout; we assume the intended f32 pooled vector here.
    x = jax.random.normal(kx, (batch, hidden_size), dtype=jnp.float32)

    # Classifier parameters, stored as (hidden_size, num_labels) = W^T vs.
    # PyTorch's nn.Linear (out, in) layout.
    weight = jax.random.normal(kw, (hidden_size, num_labels), dtype=jnp.float32) * 0.02
    bias = jax.random.normal(kb, (num_labels,), dtype=jnp.float32) * 0.02

    # One-time parameter fusion/padding (model-init time, not per call).
    wb_pad = make_classifier_params(weight, bias)
    jax.block_until_ready(wb_pad)

    logits = bert_classifier_forward(x, wb_pad, num_labels)
    jax.block_until_ready(logits)

    # Pure-JAX reference check.
    ref = x @ weight + bias[None, :]
    assert logits.shape == (batch, num_labels)
    assert jnp.allclose(logits, ref, atol=1e-5, rtol=1e-5)

    print("KERNEL_OK")
</pallas_src>

<mosaic_0001>
module attributes {stable_mosaic.version = 11 : i64} {
  func.func @classifier_kernel(%arg0: memref<8x32xf32, #tpu.memory_space<vmem>>, %arg1: memref<33x128xf32, #tpu.memory_space<vmem>>, %arg2: memref<8x128xf32, #tpu.memory_space<vmem>>) attributes {dimension_semantics = [], scalar_prefetch = 0 : i64, scratch_operands = 0 : i64, tpu.core_type = #tpu.core_type<tc>} {
    %c0 = arith.constant 0 : index
    %c0_0 = arith.constant 0 : index
    %0 = vector.load %arg0[%c0, %c0_0] : memref<8x32xf32, #tpu.memory_space<vmem>>, vector<8x32xf32>
    %c0_1 = arith.constant 0 : index
    %c0_2 = arith.constant 0 : index
    %1 = vector.load %arg1[%c0_1, %c0_2] : memref<33x128xf32, #tpu.memory_space<vmem>>, vector<32x128xf32>
    %c32 = arith.constant 32 : index
    %c0_3 = arith.constant 0 : index
    %2 = vector.load %arg1[%c32, %c0_3] : memref<33x128xf32, #tpu.memory_space<vmem>>, vector<1x128xf32>
    %cst = arith.constant dense<0.000000e+00> : vector<8x128xf32>
    %3 = tpu.matmul %0, %1, %cst {dimension_numbers = #tpu.dot_dimension_numbers<[1], [0], [0], [1], [0, 0, 1, 1], [], []>} : vector<8x32xf32>, vector<32x128xf32>, vector<8x128xf32> -> vector<8x128xf32>
    %4 = vector.broadcast %2 : vector<1x128xf32> to vector<8x128xf32>
    %5 = arith.addf %3, %4 : vector<8x128xf32>
    %c0_4 = arith.constant 0 : index
    %c0_5 = arith.constant 0 : index
    %6 = vector.load %arg2[%c0_4, %c0_5] : memref<8x128xf32, #tpu.memory_space<vmem>>, vector<8x128xf32>
    tpu.vector_store %arg2[%c0_4, %c0_5], %5 {strides = array<i32>} : memref<8x128xf32, #tpu.memory_space<vmem>>, vector<8x128xf32>,
    return
  }
}

</mosaic_0001>

<llo_original>
// kernel: bert_classifier_forward.1
$region0: #{bert_classifier_forward.1}
  #allocation0 [shape = 'u32[]', space=smem, size = 0x4, offset = 0x4, fixed_abs, tag = 'smem constant byte address 0x4 - core index']
  #allocation1 [shape = 'u32[144,128]{1,0:T(1,128)}', space=vmem, size = 0x12000, scoped, tag = 'internal scratch']
  %s0 = inlined_call_operand.hbm [shape: f32[8,32], index: 0, kind: input, shape index: {}]
  %s1 = inlined_call_operand.hbm [shape: f32[33,128], index: 1, kind: input, shape index: {}]
  %s2 = inlined_call_operand.vmem [shape: f32[8,128], index: 2, kind: output, shape index: {}]
  %s3 = sld [smem:[#allocation0]]
  $region26: #{bert_classifier_forward.1} parent=0
    _
  %s5 = ssub.s32 1, %s3
  %s6 = scalar_select 0, %s5, %s3
  $region1: #{bert_classifier_forward.1} parent=0
    #allocation2 [shape = 'u8[4096]{0}', space=vmem, size = 0x1000, scoped, tag = 'input window, operand 0, single buffered']
    #allocation3 [shape = 's32[1]{0}', space=sflag, size = 0x4, scoped, tag = 'scoped memory for bert_classifier_forward.1']
    #allocation4 [shape = 'u8[20480]{0}', space=vmem, size = 0x5000, scoped, tag = 'input window, operand 1, single buffered']
    #allocation5 [shape = 's32[1]{0}', space=sflag, size = 0x4, scoped, tag = 'scoped memory for bert_classifier_forward.1']
    %7 = vsyncpa [#allocation3], 0
    %8 = vsyncpa [#allocation5], 0
    // Predicated region
    $region2: #{bert_classifier_forward.1} parent=1 // pred_check
      _
    $region3: #{bert_classifier_forward.1} parent=1 // pred_check_branch
      %10 = sbr.rel (0) target = $region5
    $region4: #{bert_classifier_forward.1} parent=1 // pred_region
      %s12 = ssub.s32 128, 128
      %13 = vsyncadd [#allocation3], %s12
      %s15 = sshll.u32 [#allocation2], 4
      %s16 = int_to_ptr.vmem [resolvable:$true] %s15
      %18 = dma.hbm_to_vmem [thread:$0]  %s0, 128, %s16, [#allocation3]
    $region5: #{bert_classifier_forward.1} parent=1 // pred_fallthru
      _
    // Predicated region
    $region6: #{bert_classifier_forward.1} parent=1 // pred_check
      _
    $region7: #{bert_classifier_forward.1} parent=1 // pred_check_branch
      %20 = sbr.rel (0) target = $region9
    $region8: #{bert_classifier_forward.1} parent=1 // pred_region
      %s22 = ssub.s32 640, 640
      %23 = vsyncadd [#allocation5], %s22
      %s24 = sshll.u32 [#allocation4], 4
      %s25 = int_to_ptr.vmem [resolvable:$true] %s24
      %30 = dma.hbm_to_vmem [thread:$0]  %s1, 640, %s25, [#allocation5], 128, 128, 8
    $region9: #{bert_classifier_forward.1} parent=1 // pred_fallthru
      _
    // Predicated region
    $region10: #{bert_classifier_forward.1} parent=1 // pred_check
      _
    $region11: #{bert_classifier_forward.1} parent=1 // pred_check_branch
      %32 = sbr.rel (0) target = $region13
    $region12: #{bert_classifier_forward.1} parent=1 // pred_region
      %33 = dma.done [#allocation3], 128
    $region13: #{bert_classifier_forward.1} parent=1 // pred_fallthru
      _
    // Predicated region
    $region14: #{bert_classifier_forward.1} parent=1 // pred_check
      _
    $region15: #{bert_classifier_forward.1} parent=1 // pred_check_branch
      %35 = sbr.rel (0) target = $region17
    $region16: #{bert_classifier_forward.1} parent=1 // pred_region
      %36 = dma.done [#allocation5], 640
    $region17: #{bert_classifier_forward.1} parent=1 // pred_fallthru
      _
    %v37 = vld [vmem:[#allocation2] sm:$0xff]
    %v38 = vld [vmem:[#allocation4] sm:$0xff]
    %v39 = vld [vmem:[#allocation4 + $0x8] sm:$0xff]
    %v40 = vld [vmem:[#allocation4 + $0x10] sm:$0xff]
    %v41 = vld [vmem:[#allocation4 + $0x18] sm:$0xff]
    %v42 = vld [vmem:[#allocation4 + $0x20] sm:$0x1]
    %v43 = vlaneseq
    %v44 = vshrl.u32 %v43, 7
    %v45 = vsub.s32 0, %v44
    %v46 = vrot.slane %v42, %v45
    %vm47 = vcmask 261120
    %v49 = vsel %vm47, %v37, 0
    %51 = vmatprep.subr.mxu0 0.0
    %52 = vmatpush1.msra.mxu0 0.0
    %53 = vmatprep.subr.mxu0 0.0
    %54 = vmatpush1.msra.mxu0 0.0
    %55 = vmatprep.subr.mxu0 0.0
    %56 = vmatpush1.msra.mxu0 0.0
    %57 = vmatprep.subr.mxu0 0.0
    %58 = vmatpush1.msra.mxu0 0.0
    %59 = vmatprep.subr.mxu0 0.0
    %60 = vmatpush1.msra.mxu0 0.0
    %61 = vmatprep.subr.mxu0 0.0
    %62 = vmatpush1.msra.mxu0 0.0
    %63 = vmatprep.subr.mxu0 0.0
    %64 = vmatpush1.msra.mxu0 0.0
    %65 = vmatprep.subr.mxu0 0.0
    %66 = vmatpush1.msra.mxu0 0.0
    %67 = vmatprep.subr.mxu0 0.0
    %68 = vmatpush1.msra.mxu0 0.0
    %69 = vmatprep.subr.mxu0 0.0
    %70 = vmatpush1.msra.mxu0 0.0
    %71 = vmatprep.subr.mxu0 0.0
    %72 = vmatpush1.msra.mxu0 0.0
    %73 = vmatprep.subr.mxu0 0.0
    %74 = vmatpush1.msra.mxu0 0.0
    %75 = vmatprep.subr.mxu0 0.0
    %76 = vmatpush1.msra.mxu0 %v41
    %77 = vmatprep.subr.mxu0 0.0
    %78 = vmatpush1.msra.mxu0 %v40
    %79 = vmatprep.subr.mxu0 0.0
    %80 = vmatpush1.msra.mxu0 %v39
    %81 = vmatprep.subr.mxu0 0.0
    %82 = vmatpush1.msra.mxu0 %v38
    %83 = vmatprep.subr.mxu0 0.0
    %84 = vmatpush2.msra.mxu0 0.0
    %85 = vmatprep.subr.mxu0 0.0
    %86 = vmatpush2.msra.mxu0 0.0
    %87 = vmatprep.subr.mxu0 0.0
    %88 = vmatpush2.msra.mxu0 0.0
    %89 = vmatprep.subr.mxu0 0.0
    %90 = vmatpush2.msra.mxu0 0.0
    %91 = vmatprep.subr.mxu0 0.0
    %92 = vmatpush2.msra.mxu0 0.0
    %93 = vmatprep.subr.mxu0 0.0
    %94 = vmatpush2.msra.mxu0 0.0
    %95 = vmatprep.subr.mxu0 0.0
    %96 = vmatpush2.msra.mxu0 0.0
    %97 = vmatprep.subr.mxu0 0.0
    %98 = vmatpush2.msra.mxu0 0.0
    %99 = vmatprep.subr.mxu0 0.0
    %100 = vmatpush2.msra.mxu0 0.0
    %101 = vmatprep.subr.mxu0 0.0
    %102 = vmatpush2.msra.mxu0 0.0
    %103 = vmatprep.subr.mxu0 0.0
    %104 = vmatpush2.msra.mxu0 0.0
    %105 = vmatprep.subr.mxu0 0.0
    %106 = vmatpush2.msra.mxu0 0.0
    %107 = vmatprep.subr.mxu0 0.0
    %108 = vmatpush2.msra.mxu0 0.0
    %109 = vmatprep.subr.mxu0 0.0
    %110 = vmatpush2.msra.mxu0 0.0
    %111 = vmatprep.subr.mxu0 0.0
    %112 = vmatpush2.msra.mxu0 0.0
    %113 = vmatprep.subr.mxu0 0.0
    %114 = vmatpush2.msra.mxu0 0.0
    %115 = vmatprep.mubr.f32.mxu0 0.0
    %116 = vmatmul.mubr.f32.gmra.mxu0 %v49
    %v117 = vpop.f32.mrf.mxu0
    %v118 = vadd.f32 %v46, %v117
    %v119 = vpop.f32.mrf.mxu0
    %120 = vdwg.mxu0
    %121 = vst [vmem:[%s2] sm:$0xff] %v118
    // Predicated region
    $region18: #{bert_classifier_forward.1} parent=1 // pred_check
      _
    $region19: #{bert_classifier_forward.1} parent=1 // pred_check_branch
      %123 = sbr.rel (0) target = $region21
    $region20: #{bert_classifier_forward.1} parent=1 // pred_region
      _
    $region21: #{bert_classifier_forward.1} parent=1 // pred_fallthru
      _
    // Predicated region
    $region22: #{bert_classifier_forward.1} parent=1 // pred_check
      _
    $region23: #{bert_classifier_forward.1} parent=1 // pred_check_branch
      %125 = sbr.rel (0) target = $region25
    $region24: #{bert_classifier_forward.1} parent=1 // pred_region
      _
    $region25: #{bert_classifier_forward.1} parent=1 // pred_fallthru
      _
    %126 = vsyncpa [#allocation3], 1
    %127 = vsyncpa [#allocation5], 1

</llo_original>
